<compile_context>
chip_gen: v7x
topology: tpu7x:2x2x1
jax: 0.10.0
libtpu: 0.0.40
codegen_flags: <defaults>
</compile_context>

<pallas_src>
import jax
import jax.numpy as jnp
import numpy as np
from jax import lax
from jax.experimental import pallas as pl
from jax.experimental.pallas import tpu as pltpu


def _make_conv_kernel(H, WC, bi):
    """im2col patch build (pad rows fused) + one MXU contraction for bi images."""
    def kernel(x_ref, w_ref, o_ref, p_ref):
        # x_ref: (bi, H, WC)    bf16 packed NHWC input (channel fastest on lanes)
        # w_ref: (3*WC, N)      bf16 block-sparse im2col weight (kw shift + padding + shuffle folded)
        # o_ref: (bi, H, N)     bf16 packed conv(+pixel-shuffle column order) output
        # p_ref: (bi*H, 3*WC)   bf16 VMEM scratch: im2col patch matrix
        for b in range(bi):                    # static unroll over the images in this block
            base = b * H
            xb = x_ref[b]                                                   # (H, WC)
            # kh = 1 (center) band
            p_ref[base:base + H, WC:2 * WC] = xb
            # kh = 0 band: rows shifted down by one; only row 0 is the zero halo
            p_ref[base:base + 1, 0:WC] = jnp.zeros((1, WC), p_ref.dtype)
            if H > 1:
                p_ref[base + 1:base + H, 0:WC] = xb[0:H - 1, :]
                # kh = 2 band: rows shifted up by one; only the last row is the zero halo
                p_ref[base:base + H - 1, 2 * WC:3 * WC] = xb[1:H, :]
            p_ref[base + H - 1:base + H, 2 * WC:3 * WC] = jnp.zeros((1, WC), p_ref.dtype)

        # Single MXU contraction for the whole block: M = bi*H, K = 3*WC, f32 accumulation.
        acc = jnp.dot(p_ref[...], w_ref[...], preferred_element_type=jnp.float32)
        for b in range(bi):
            o_ref[b] = acc[b * H:(b + 1) * H, :].astype(o_ref.dtype)

    return kernel


def conv3x3_pallas(x_packed, w_big, H, W, Cin):
    """x_packed: (B, H, W*Cin) bf16; w_big: (3*W*Cin, N) bf16 -> (B, H, N) bf16."""
    B = x_packed.shape[0]
    WC = W * Cin
    K = 3 * WC
    N = w_big.shape[1]
    Ct = N // W

    # Fold as many images as possible into the matmul M dimension (target ~256 rows);
    # bi must divide B so every grid step gets a full block.
    rows_target = 256
    bi = max(1, min(B, rows_target // max(H, 1)))
    while bi > 1 and B % bi != 0:
        bi -= 1
    grid = (B // bi,)

    kernel = _make_conv_kernel(H, WC, bi)

    # True conv FLOPs (not the block-sparse padded K) as the scheduling hint.
    flops = 2 * B * H * W * 9 * Cin * Ct
    bytes_accessed = (x_packed.size * 2) + (w_big.size * 2) + (B * H * N * 2)

    # VMEM budget from actual buffer sums (weight single-buffered), with headroom; keep well
    # under v7x's 64 MiB/TC.
    in_bytes = bi * H * WC * 2
    w_bytes = K * N * 2
    out_bytes = bi * H * N * 2
    patch_bytes = bi * H * K * 2
    vmem_needed = 2 * in_bytes + w_bytes + 2 * out_bytes + patch_bytes
    vmem_limit = int(min(48 << 20, max(8 << 20, 2 * vmem_needed)))

    return pl.pallas_call(
        kernel,
        out_shape=jax.ShapeDtypeStruct((B, H, N), jnp.bfloat16),
        grid_spec=pltpu.PrefetchScalarGridSpec(
            num_scalar_prefetch=0,
            grid=grid,
            in_specs=[
                pl.BlockSpec((bi, H, WC), lambda g: (g, 0, 0)),
                # Constant index_map -> weight DMA happens once; single-buffer it.
                pl.BlockSpec((K, N), lambda g: (0, 0), pipeline_mode=pl.Buffered(1)),
            ],
            out_specs=pl.BlockSpec((bi, H, N), lambda g: (g, 0, 0)),
            scratch_shapes=[pltpu.VMEM((bi * H, K), jnp.bfloat16)],
        ),
        compiler_params=pltpu.CompilerParams(
            dimension_semantics=("parallel",),
            vmem_limit_bytes=vmem_limit,
        ),
        cost_estimate=pl.CostEstimate(
            flops=flops, transcendentals=0, bytes_accessed=bytes_accessed),
    )(x_packed, w_big)


def depth_to_space_upsample2d(x_nchw, weight_oihw, scale_factor=2):
    """Forward pass equivalent to the PyTorch module.

    x_nchw:      (B, Cin, H, W)
    weight_oihw: (out_channels * 2**scale_factor, Cin, 3, 3)   (PyTorch conv layout)
    returns:     (B, out_channels, H*scale_factor, W*scale_factor) float32
    """
    r = scale_factor
    n = 2 ** scale_factor
    assert n == r * r, "PixelShuffle consistency only holds for scale_factor=2"
    B, Cin, H, W = x_nchw.shape
    Ct = weight_oihw.shape[0]
    C = Ct // n

    # glue: NCHW -> packed lane-dense NHWC (B, H, W*Cin), bf16 (one fused transpose+cast under jit).
    x_packed = jnp.transpose(x_nchw, (0, 2, 3, 1)).astype(jnp.bfloat16).reshape(B, H, W * Cin)

    # glue: block-sparse im2col weight, built once.
    #   rows:    (kh, p, ci)  -> kh*W*Cin + p*Cin + ci        (no pad columns: K = 3*W*Cin)
    #   columns: (c, i, w, j) -> ((c*r + i)*W + w)*r + j      (PixelShuffle folded into the order)
    #   w_big[(kh,p,ci),(c,i,w,j)] = weight[c*r*r + i*r + j, ci, kh, p - w + 1]  if 0 <= p-w+1 <= 2
    wt = jnp.transpose(weight_oihw, (2, 3, 1, 0))                   # (kh, kw, ci, ct)
    kw_idx = jnp.arange(3)[:, None, None]
    p_idx = jnp.arange(W)[None, :, None]
    w_idx = jnp.arange(W)[None, None, :]
    sel = (p_idx == w_idx + kw_idx - 1).astype(wt.dtype)            # (3, W, W); boundary -> zero col
    w_big = jnp.einsum("kpw,hkcd->hpcwd", sel, wt)                  # (kh, p, ci, w, ct)
    w_big = w_big.reshape(3, W, Cin, W, C, r, r)                    # (kh, p, ci, w, c, i, j)
    w_big = jnp.transpose(w_big, (0, 1, 2, 4, 5, 3, 6))             # (kh, p, ci, c, i, w, j)
    w_big = w_big.reshape(3 * W * Cin, C * r * W * r).astype(jnp.bfloat16)

    # hot path: 3x3 conv (padding fused, batch folded into M) in Pallas, bf16 out.
    conv_packed = conv3x3_pallas(x_packed, w_big, H, W, Cin)        # (B, H, C*r*W*r) bf16

    # glue: PixelShuffle columns are already ordered (c, i, w, j) -> one large-granule transpose.
    y = conv_packed.reshape(B, H, C, r, W, r)
    y = jnp.transpose(y, (0, 2, 1, 3, 4, 5))                        # (B, C, H, r, W, r)
    return y.reshape(B, C, H * r, W * r).astype(jnp.float32)


def _reference(x_nchw, weight_oihw, scale_factor=2):
    """Pure-JAX reference (lax conv + manual pixel shuffle) for verification."""
    r = scale_factor
    conv = lax.conv_general_dilated(
        x_nchw, weight_oihw, window_strides=(1, 1), padding=((1, 1), (1, 1)),
        dimension_numbers=("NCHW", "OIHW", "NCHW"))
    B, Ct, H, W = conv.shape
    C = Ct // (r * r)
    y = conv.reshape(B, C, r, r, H, W)
    y = jnp.transpose(y, (0, 1, 4, 2, 5, 3))
    return y.reshape(B, C, H * r, W * r)


if __name__ == "__main__":
    B, Cin, H, W = 2, 4, 16, 16
    out_channels, scale_factor = 4, 2
    n = 2 ** scale_factor

    key = jax.random.PRNGKey(0)
    kx, kw = jax.random.split(key)
    x = jax.random.normal(kx, (B, Cin, H, W), dtype=jnp.float32)
    # matches nn.Conv2d(Cin, out_channels*n, 3, padding=1, bias=False) weight shape
    weight = jax.random.normal(kw, (out_channels * n, Cin, 3, 3), dtype=jnp.float32) * 0.1

    fwd = jax.jit(lambda a, b: depth_to_space_upsample2d(a, b, scale_factor))
    out = jax.block_until_ready(fwd(x, weight))

    # Reference on bf16-rounded inputs (the kernel's matmul runs in bf16 with f32 accumulation
    # and emits bf16).
    xb = x.astype(jnp.bfloat16).astype(jnp.float32)
    wb = weight.astype(jnp.bfloat16).astype(jnp.float32)
    ref = jax.block_until_ready(_reference(xb, wb, scale_factor))

    assert out.shape == (B, out_channels, H * scale_factor, W * scale_factor), out.shape
    np.testing.assert_allclose(np.asarray(out), np.asarray(ref), rtol=1e-2, atol=1e-2)

    print("KERNEL_OK")
</pallas_src>

<mosaic_0001>
module attributes {stable_mosaic.version = 11 : i64} {
  func.func @kernel(%arg0: i32, %arg1: memref<2x16x64xbf16, #tpu.memory_space<vmem>>, %arg2: memref<192x256xbf16, #tpu.memory_space<vmem>>, %arg3: memref<2x16x256xbf16, #tpu.memory_space<vmem>>, %arg4: memref<32x192xbf16, #tpu.memory_space<vmem>>) attributes {dimension_semantics = [#tpu.dimension_semantics<parallel>], iteration_bounds = array<i64: 1>, scalar_prefetch = 0 : i64, scratch_operands = 1 : i64, tpu.core_type = #tpu.core_type<tc>, window_params = [{transform_indices = @transform_0, window_bounds = array<i64: 2, 16, 64>}, {pipeline_mode = #tpu.pipeline_mode<synchronous>, transform_indices = @transform_1, window_bounds = array<i64: 192, 256>}, {transform_indices = @transform_2, window_bounds = array<i64: 2, 16, 256>}]} {
    %c0 = arith.constant 0 : index
    %c0_0 = arith.constant 0 : index
    %c0_1 = arith.constant 0 : index
    %0 = vector.load %arg1[%c0, %c0_0, %c0_1] : memref<2x16x64xbf16, #tpu.memory_space<vmem>>, vector<1x16x64xbf16>
    %1 = vector.shape_cast %0 : vector<1x16x64xbf16> to vector<16x64xbf16>
    %c0_2 = arith.constant 0 : index
    %c64 = arith.constant 64 : index
    %2 = vector.load %arg4[%c0_2, %c64] : memref<32x192xbf16, #tpu.memory_space<vmem>>, vector<16x64xbf16>
    tpu.vector_store %arg4[%c0_2, %c64], %1 {strides = array<i32>} : memref<32x192xbf16, #tpu.memory_space<vmem>>, vector<16x64xbf16>,
    %cst = arith.constant 0.000000e+00 : bf16
    %3 = vector.broadcast %cst : bf16 to vector<1x64xbf16>
    %c0_3 = arith.constant 0 : index
    %c0_4 = arith.constant 0 : index
    %4 = vector.load %arg4[%c0_3, %c0_4] : memref<32x192xbf16, #tpu.memory_space<vmem>>, vector<1x64xbf16>
    tpu.vector_store %arg4[%c0_3, %c0_4], %3 {strides = array<i32>} : memref<32x192xbf16, #tpu.memory_space<vmem>>, vector<1x64xbf16>,
    %5 = vector.extract_strided_slice %1 {offsets = [0, 0], sizes = [15, 64], strides = [1, 1]} : vector<16x64xbf16> to vector<15x64xbf16>
    %c1 = arith.constant 1 : index
    %c0_5 = arith.constant 0 : index
    %6 = vector.load %arg4[%c1, %c0_5] : memref<32x192xbf16, #tpu.memory_space<vmem>>, vector<15x64xbf16>
    tpu.vector_store %arg4[%c1, %c0_5], %5 {strides = array<i32>} : memref<32x192xbf16, #tpu.memory_space<vmem>>, vector<15x64xbf16>,
    %7 = vector.extract_strided_slice %1 {offsets = [1, 0], sizes = [15, 64], strides = [1, 1]} : vector<16x64xbf16> to vector<15x64xbf16>
    %c0_6 = arith.constant 0 : index
    %c128 = arith.constant 128 : index
    %8 = vector.load %arg4[%c0_6, %c128] : memref<32x192xbf16, #tpu.memory_space<vmem>>, vector<15x64xbf16>
    tpu.vector_store %arg4[%c0_6, %c128], %7 {strides = array<i32>} : memref<32x192xbf16, #tpu.memory_space<vmem>>, vector<15x64xbf16>,
    %cst_7 = arith.constant 0.000000e+00 : bf16
    %9 = vector.broadcast %cst_7 : bf16 to vector<1x64xbf16>
    %c15 = arith.constant 15 : index
    %c128_8 = arith.constant 128 : index
    %10 = vector.load %arg4[%c15, %c128_8] : memref<32x192xbf16, #tpu.memory_space<vmem>>, vector<1x64xbf16>
    tpu.vector_store %arg4[%c15, %c128_8], %9 {strides = array<i32>} : memref<32x192xbf16, #tpu.memory_space<vmem>>, vector<1x64xbf16>,
    %c1_9 = arith.constant 1 : index
    %c0_10 = arith.constant 0 : index
    %c0_11 = arith.constant 0 : index
    %11 = vector.load %arg1[%c1_9, %c0_10, %c0_11] : memref<2x16x64xbf16, #tpu.memory_space<vmem>>, vector<1x16x64xbf16>
    %12 = vector.shape_cast %11 : vector<1x16x64xbf16> to vector<16x64xbf16>
    %c16 = arith.constant 16 : index
    %c64_12 = arith.constant 64 : index
    %13 = vector.load %arg4[%c16, %c64_12] : memref<32x192xbf16, #tpu.memory_space<vmem>>, vector<16x64xbf16>
    tpu.vector_store %arg4[%c16, %c64_12], %12 {strides = array<i32>} : memref<32x192xbf16, #tpu.memory_space<vmem>>, vector<16x64xbf16>,
    %cst_13 = arith.constant 0.000000e+00 : bf16
    %14 = vector.broadcast %cst_13 : bf16 to vector<1x64xbf16>
    %c16_14 = arith.constant 16 : index
    %c0_15 = arith.constant 0 : index
    %15 = vector.load %arg4[%c16_14, %c0_15] : memref<32x192xbf16, #tpu.memory_space<vmem>>, vector<1x64xbf16>
    tpu.vector_store %arg4[%c16_14, %c0_15], %14 {strides = array<i32>} : memref<32x192xbf16, #tpu.memory_space<vmem>>, vector<1x64xbf16>,
    %16 = vector.extract_strided_slice %12 {offsets = [0, 0], sizes = [15, 64], strides = [1, 1]} : vector<16x64xbf16> to vector<15x64xbf16>
    %c17 = arith.constant 17 : index
    %c0_16 = arith.constant 0 : index
    %17 = vector.load %arg4[%c17, %c0_16] : memref<32x192xbf16, #tpu.memory_space<vmem>>, vector<15x64xbf16>
    tpu.vector_store %arg4[%c17, %c0_16], %16 {strides = array<i32>} : memref<32x192xbf16, #tpu.memory_space<vmem>>, vector<15x64xbf16>,
    %18 = vector.extract_strided_slice %12 {offsets = [1, 0], sizes = [15, 64], strides = [1, 1]} : vector<16x64xbf16> to vector<15x64xbf16>
    %c16_17 = arith.constant 16 : index
    %c128_18 = arith.constant 128 : index
    %19 = vector.load %arg4[%c16_17, %c128_18] : memref<32x192xbf16, #tpu.memory_space<vmem>>, vector<15x64xbf16>
    tpu.vector_store %arg4[%c16_17, %c128_18], %18 {strides = array<i32>} : memref<32x192xbf16, #tpu.memory_space<vmem>>, vector<15x64xbf16>,
    %cst_19 = arith.constant 0.000000e+00 : bf16
    %20 = vector.broadcast %cst_19 : bf16 to vector<1x64xbf16>
    %c31 = arith.constant 31 : index
    %c128_20 = arith.constant 128 : index
    %21 = vector.load %arg4[%c31, %c128_20] : memref<32x192xbf16, #tpu.memory_space<vmem>>, vector<1x64xbf16>
    tpu.vector_store %arg4[%c31, %c128_20], %20 {strides = array<i32>} : memref<32x192xbf16, #tpu.memory_space<vmem>>, vector<1x64xbf16>,
    %c0_21 = arith.constant 0 : index
    %c0_22 = arith.constant 0 : index
    %22 = vector.load %arg4[%c0_21, %c0_22] : memref<32x192xbf16, #tpu.memory_space<vmem>>, vector<32x192xbf16>
    %c0_23 = arith.constant 0 : index
    %c0_24 = arith.constant 0 : index
    %23 = vector.load %arg2[%c0_23, %c0_24] : memref<192x256xbf16, #tpu.memory_space<vmem>>, vector<192x256xbf16>
    %cst_25 = arith.constant dense<0.000000e+00> : vector<32x256xf32>
    %24 = tpu.matmul %22, %23, %cst_25 {dimension_numbers = #tpu.dot_dimension_numbers<[1], [0], [0], [1], [0, 0, 1, 1], [], []>} : vector<32x192xbf16>, vector<192x256xbf16>, vector<32x256xf32> -> vector<32x256xf32>
    %25 = vector.extract_strided_slice %24 {offsets = [0, 0], sizes = [16, 256], strides = [1, 1]} : vector<32x256xf32> to vector<16x256xf32>
    %26 = arith.truncf %25 : vector<16x256xf32> to vector<16x256xbf16>
    %c0_26 = arith.constant 0 : index
    %c0_27 = arith.constant 0 : index
    %c0_28 = arith.constant 0 : index
    %27 = vector.load %arg3[%c0_26, %c0_27, %c0_28] : memref<2x16x256xbf16, #tpu.memory_space<vmem>>, vector<1x16x256xbf16>
    %28 = vector.shape_cast %27 : vector<1x16x256xbf16> to vector<16x256xbf16>
    %29 = vector.shape_cast %26 : vector<16x256xbf16> to vector<1x16x256xbf16>
    tpu.vector_store %arg3[%c0_26, %c0_27, %c0_28], %29 {strides = array<i32>} : memref<2x16x256xbf16, #tpu.memory_space<vmem>>, vector<1x16x256xbf16>,
    %30 = vector.extract_strided_slice %24 {offsets = [16, 0], sizes = [16, 256], strides = [1, 1]} : vector<32x256xf32> to vector<16x256xf32>
    %31 = arith.truncf %30 : vector<16x256xf32> to vector<16x256xbf16>
    %c1_29 = arith.constant 1 : index
    %c0_30 = arith.constant 0 : index
    %c0_31 = arith.constant 0 : index
    %32 = vector.load %arg3[%c1_29, %c0_30, %c0_31] : memref<2x16x256xbf16, #tpu.memory_space<vmem>>, vector<1x16x256xbf16>
    %33 = vector.shape_cast %32 : vector<1x16x256xbf16> to vector<16x256xbf16>
    %34 = vector.shape_cast %31 : vector<16x256xbf16> to vector<1x16x256xbf16>
    tpu.vector_store %arg3[%c1_29, %c0_30, %c0_31], %34 {strides = array<i32>} : memref<2x16x256xbf16, #tpu.memory_space<vmem>>, vector<1x16x256xbf16>,
    return
  }
  func.func @transform_0(%arg0: i32) -> (i32, i32, i32) {
    %c0_i32 = arith.constant 0 : i32
    %c0_i32_0 = arith.constant 0 : i32
    %c0_i32_1 = arith.constant 0 : i32
    return %arg0, %c0_i32, %c0_i32_0 : i32, i32, i32
  }
  func.func @transform_1(%arg0: i32) -> (i32, i32) {
    %c0_i32 = arith.constant 0 : i32
    %c0_i32_0 = arith.constant 0 : i32
    %c0_i32_1 = arith.constant 0 : i32
    return %c0_i32, %c0_i32_0 : i32, i32
  }
  func.func @transform_2(%arg0: i32) -> (i32, i32, i32) {
    %c0_i32 = arith.constant 0 : i32
    %c0_i32_0 = arith.constant 0 : i32
    %c0_i32_1 = arith.constant 0 : i32
    return %arg0, %c0_i32, %c0_i32_0 : i32, i32, i32
  }
}

</mosaic_0001>

<llo_original>
// kernel: _lambda_.1
$region0: #{_lambda_.1}
  #allocation0 [shape = 'u32[]', space=smem, size = 0x4, offset = 0x4, fixed_abs, tag = 'smem constant byte address 0x4 - core index']
  #allocation1 [shape = 'u32[144,128]{1,0:T(1,128)}', space=vmem, size = 0x12000, scoped, tag = 'internal scratch']
  #allocation2 [shape = 'bf16[32,192]{1,0:T(16,128)(2,1)}', space=vmem, size = 0x4000, scoped, tag = 'scratch operand']
  %s0 = inlined_call_operand.vmem [shape: bf16[2,16,64], index: 0, kind: input, shape index: {}]
  %s1 = inlined_call_operand.vmem [shape: bf16[192,256], index: 1, kind: input, shape index: {}]
  %s2 = inlined_call_operand.vmem [shape: bf16[2,16,256], index: 2, kind: output, shape index: {}]
  %s3 = sld [smem:[#allocation0]]
  $region18: #{_lambda_.1} parent=0
    _
  %s5 = ssub.s32 1, %s3
  %s6 = scalar_select 0, %s5, %s3
  // Predicated region
  $region2: #{_lambda_.1} parent=0 // pred_check
    _
  $region3: #{_lambda_.1} parent=0 // pred_check_branch
    %8 = sbr.rel (0) target = $region5
  $region4: #{_lambda_.1} parent=0 // pred_region
    _
  $region5: #{_lambda_.1} parent=0 // pred_fallthru
    _
  // Predicated region
  $region6: #{_lambda_.1} parent=0 // pred_check
    _
  $region7: #{_lambda_.1} parent=0 // pred_check_branch
    %10 = sbr.rel (0) target = $region9
  $region8: #{_lambda_.1} parent=0 // pred_region
    _
  $region9: #{_lambda_.1} parent=0 // pred_fallthru
    _
  %v12 = vld [vmem:[%s0] sm:$0xf]
  %v13 = vld [vmem:[%s0 + $0x4] sm:$0xf]
  %v16 = vunpack.c.l.b16 %v12
  %v17 = vunpack.c.l.b16 %v13
  %v18 = vpack.c.b16 %v17, %v16
  %19 = vrot.lane.b32.xlu0 %v18, 64
  %v20 = vpop.permute.xlu0 %19
  %vm22 = vcmask 1048064
  %23 = vst.msk [vmem:[#allocation2] sm:$0xff] %vm22, %v20
  %vm24 = vcmask 516096
  %vm25 = vsmask.f32 256
  %vm26 = vmand %vm24, %vm25
  %v27 = vld [vmem:[#allocation2] sm:$0x1]
  %v28 = vsel %vm26, 0, %v27
  %29 = vst [vmem:[#allocation2] sm:$0x1] %v28
  %v31 = vshrl.u32 %v18, 16
  %v33 = vrot.slane %v31, 7
  %v34 = vshll.u32 %v18, 16
  %v36 = vor.u32 %v33, %v34
  %vm38 = vcmask 523264
  %vm39 = vsmask.f32 7938
  %vm40 = vmand %vm38, %vm39
  %v41 = vld [vmem:[#allocation2] sm:$0xff]
  %v42 = vsel %vm40, %v36, %v41
  %43 = vst [vmem:[#allocation2] sm:$0xff] %v42
  %v44 = vrot.slane %v34, 1
  %v45 = vor.u32 %v31, %v44
  %vm47 = vsmask.f32 7424
  %vm48 = vmand %vm38, %vm47
  %v49 = vld [vmem:[#allocation2 + $0x8] sm:$0xff]
  %v50 = vsel %vm48, %v45, %v49
  %51 = vst [vmem:[#allocation2 + $0x8] sm:$0xff] %v50
  %vm52 = vcmask 523271
  %vm53 = vsmask.f32 7966
  %vm54 = vmand %vm52, %vm53
  %v55 = vld [vmem:[#allocation2 + $0x8] sm:$0x80]
  %v56 = vsel %vm54, 0, %v55
  %57 = vst [vmem:[#allocation2 + $0x8] sm:$0x80] %v56
  %s58 = scalar_lea.vmem %s0, 8
  %v59 = vld [vmem:[%s58] sm:$0xf]
  %v60 = vld [vmem:[%s58 + $0x4] sm:$0xf]
  %v63 = vunpack.c.l.b16 %v59
  %v64 = vunpack.c.l.b16 %v60
  %v65 = vpack.c.b16 %v64, %v63
  %66 = vrot.lane.b32.xlu0 %v65, 64
  %v67 = vpop.permute.xlu0 %66
  %69 = vst.msk [vmem:[#allocation2 + $0x10] sm:$0xff] %vm22, %v67
  %v70 = vld [vmem:[#allocation2 + $0x10] sm:$0x1]
  %v71 = vsel %vm26, 0, %v70
  %72 = vst [vmem:[#allocation2 + $0x10] sm:$0x1] %v71
  %v74 = vshrl.u32 %v65, 16
  %v76 = vrot.slane %v74, 7
  %v77 = vshll.u32 %v65, 16
  %v79 = vor.u32 %v76, %v77
  %v81 = vld [vmem:[#allocation2 + $0x10] sm:$0xff]
  %v82 = vsel %vm40, %v79, %v81
  %83 = vst [vmem:[#allocation2 + $0x10] sm:$0xff] %v82
  %v84 = vrot.slane %v77, 1
  %v85 = vor.u32 %v74, %v84
  %v87 = vld [vmem:[#allocation2 + $0x18] sm:$0xff]
  %v88 = vsel %vm48, %v85, %v87
  %89 = vst [vmem:[#allocation2 + $0x18] sm:$0xff] %v88
  %v90 = vld [vmem:[#allocation2 + $0x18] sm:$0x80]
  %v91 = vsel %vm54, 0, %v90
  %92 = vst [vmem:[#allocation2 + $0x18] sm:$0x80] %v91
  %v93 = vld [vmem:[#allocation2] sm:$0xff]
  %v94 = vld [vmem:[#allocation2 + $0x8] sm:$0xff]
  %v95 = vld [vmem:[#allocation2 + $0x10] sm:$0xff]
  %v96 = vld [vmem:[#allocation2 + $0x18] sm:$0xff]
  %v97 = vld [vmem:[%s1] sm:$0xff]
  %v98 = vld [vmem:[%s1 + $0x8] sm:$0xff]
  %v99 = vld [vmem:[%s1 + $0x10] sm:$0xff]
  %v100 = vld [vmem:[%s1 + $0x18] sm:$0xff]
  %v101 = vld [vmem:[%s1 + $0x20] sm:$0xff]
  %v102 = vld [vmem:[%s1 + $0x28] sm:$0xff]
  %v103 = vld [vmem:[%s1 + $0x30] sm:$0xff]
  %v104 = vld [vmem:[%s1 + $0x38] sm:$0xff]
  %v105 = vld [vmem:[%s1 + $0x40] sm:$0xff]
  %v106 = vld [vmem:[%s1 + $0x48] sm:$0xff]
  %v107 = vld [vmem:[%s1 + $0x50] sm:$0xff]
  %v108 = vld [vmem:[%s1 + $0x58] sm:$0xff]
  %v109 = vld [vmem:[%s1 + $0x60] sm:$0xff]
  %v110 = vld [vmem:[%s1 + $0x68] sm:$0xff]
  %v111 = vld [vmem:[%s1 + $0x70] sm:$0xff]
  %v112 = vld [vmem:[%s1 + $0x78] sm:$0xff]
  %v113 = vld [vmem:[%s1 + $0x80] sm:$0xff]
  %v114 = vld [vmem:[%s1 + $0x88] sm:$0xff]
  %v115 = vld [vmem:[%s1 + $0x90] sm:$0xff]
  %v116 = vld [vmem:[%s1 + $0x98] sm:$0xff]
  %v117 = vld [vmem:[%s1 + $0xa0] sm:$0xff]
  %v118 = vld [vmem:[%s1 + $0xa8] sm:$0xff]
  %v119 = vld [vmem:[%s1 + $0xb0] sm:$0xff]
  %v120 = vld [vmem:[%s1 + $0xb8] sm:$0xff]
  %v145 = vunpack.c.l.b16 %v97
  %v146 = vunpack.c.h.b16 %v97
  %v147 = vunpack.c.l.b16 %v98
  %v148 = vunpack.c.h.b16 %v98
  %v149 = vunpack.c.l.b16 %v99
  %v150 = vunpack.c.h.b16 %v99
  %v151 = vunpack.c.l.b16 %v100
  %v152 = vunpack.c.h.b16 %v100
  %v153 = vunpack.c.l.b16 %v101
  %v154 = vunpack.c.h.b16 %v101
  %v155 = vunpack.c.l.b16 %v102
  %v156 = vunpack.c.h.b16 %v102
  %v157 = vunpack.c.l.b16 %v103
  %v158 = vunpack.c.h.b16 %v103
  %v159 = vunpack.c.l.b16 %v104
  %v160 = vunpack.c.h.b16 %v104
  %v161 = vunpack.c.l.b16 %v105
  %v162 = vunpack.c.h.b16 %v105
  %v163 = vunpack.c.l.b16 %v106
  %v164 = vunpack.c.h.b16 %v106
  %v165 = vunpack.c.l.b16 %v107
  %v166 = vunpack.c.h.b16 %v107
  %v167 = vunpack.c.l.b16 %v108
  %v168 = vunpack.c.h.b16 %v108
  %v169 = vunpack.c.l.b16 %v109
  %v170 = vunpack.c.h.b16 %v109
  %v171 = vunpack.c.l.b16 %v110
  %v172 = vunpack.c.h.b16 %v110
  %v173 = vunpack.c.l.b16 %v111
  %v174 = vunpack.c.h.b16 %v111
  %v175 = vunpack.c.l.b16 %v112
  %v176 = vunpack.c.h.b16 %v112
  %v177 = vunpack.c.l.b16 %v113
  %v178 = vunpack.c.h.b16 %v113
  %v179 = vunpack.c.l.b16 %v114
  %v180 = vunpack.c.h.b16 %v114
  %v181 = vunpack.c.l.b16 %v115
  %v182 = vunpack.c.h.b16 %v115
  %v183 = vunpack.c.l.b16 %v116
  %v184 = vunpack.c.h.b16 %v116
  %v185 = vunpack.c.l.b16 %v117
  %v186 = vunpack.c.h.b16 %v117
  %v187 = vunpack.c.l.b16 %v118
  %v188 = vunpack.c.h.b16 %v118
  %v189 = vunpack.c.l.b16 %v119
  %v190 = vunpack.c.h.b16 %v119
  %v191 = vunpack.c.l.b16 %v120
  %v192 = vunpack.c.h.b16 %v120
  %v193 = vpack.c.b16 %v147, %v145
  %v194 = vpack.c.b16 %v148, %v146
  %v195 = vpack.c.b16 %v151, %v149
  %v196 = vpack.c.b16 %v152, %v150
  %v197 = vpack.c.b16 %v155, %v153
  %v198 = vpack.c.b16 %v156, %v154
  %v199 = vpack.c.b16 %v159, %v157
  %v200 = vpack.c.b16 %v160, %v158
  %v201 = vpack.c.b16 %v163, %v161
  %v202 = vpack.c.b16 %v164, %v162
  %v203 = vpack.c.b16 %v167, %v165
  %v204 = vpack.c.b16 %v168, %v166
  %v205 = vpack.c.b16 %v171, %v169
  %v206 = vpack.c.b16 %v172, %v170
  %v207 = vpack.c.b16 %v175, %v173
  %v208 = vpack.c.b16 %v176, %v174
  %v209 = vpack.c.b16 %v179, %v177
  %v210 = vpack.c.b16 %v180, %v178
  %v211 = vpack.c.b16 %v183, %v181
  %v212 = vpack.c.b16 %v184, %v182
  %v213 = vpack.c.b16 %v187, %v185
  %v214 = vpack.c.b16 %v188, %v186
  %v215 = vpack.c.b16 %v191, %v189
  %v216 = vpack.c.b16 %v192, %v190
  %vm241 = vcmask 523264
  %v243 = vsel %vm241, %v94, 0
  %v246 = vsel %vm241, %v96, 0
  %248 = vmatprep.subr.bf16.mxu0 %v194
  %249 = vmatpush1.bf16.msra.mxu0 %v193
  %250 = vmatprep.subr.bf16.mxu0 %v196
  %251 = vmatpush1.bf16.msra.mxu0 %v195
  %252 = vmatprep.subr.bf16.mxu0 %v198
  %253 = vmatpush1.bf16.msra.mxu0 %v197
  %254 = vmatprep.subr.bf16.mxu0 %v200
  %255 = vmatpush1.bf16.msra.mxu0 %v199
  %256 = vmatprep.subr.bf16.mxu0 %v202
  %257 = vmatpush1.bf16.msra.mxu0 %v201
  %258 = vmatprep.subr.bf16.mxu0 %v204
  %259 = vmatpush1.bf16.msra.mxu0 %v203
  %260 = vmatprep.subr.bf16.mxu0 %v206
  %261 = vmatpush1.bf16.msra.mxu0 %v205
  %262 = vmatprep.subr.bf16.mxu0 %v208
  %263 = vmatpush1.bf16.msra.mxu0 %v207
  %264 = vmatprep.subr.bf16.mxu0 %v210
  %265 = vmatpush1.bf16.msra.mxu0 %v209
  %266 = vmatprep.subr.bf16.mxu0 %v212
  %267 = vmatpush1.bf16.msra.mxu0 %v211
  %268 = vmatprep.subr.bf16.mxu0 %v214
  %269 = vmatpush1.bf16.msra.mxu0 %v213
  %270 = vmatprep.subr.bf16.mxu0 %v216
  %271 = vmatpush1.bf16.msra.mxu0 %v215
  %272 = vmatprep.subr.bf16.mxu0 0
  %273 = vmatpush1.bf16.msra.mxu0 0
  %274 = vmatprep.subr.bf16.mxu0 0
  %275 = vmatpush1.bf16.msra.mxu0 0
  %276 = vmatprep.subr.bf16.mxu0 0
  %277 = vmatpush1.bf16.msra.mxu0 0
  %278 = vmatprep.subr.bf16.mxu0 0
  %279 = vmatpush1.bf16.msra.mxu0 0
  %280 = vmatprep.mubr.bf16.mxu0 %v243
  %281 = vmatmul.mubr.bf16.gmra.mrb[0].mxu0 %v93
  %v282 = vpop.f32.mrb[0].mxu0
  %v283 = vadd.f32 0.0, %v282
  %v284 = vpop.f32.mrb[0].mxu0
  %v285 = vadd.f32 0.0, %v284
  %v286 = vpop.f32.mrb[0].mxu0
  %v287 = vadd.f32 0.0, %v286
  %v288 = vpop.f32.mrb[0].mxu0
  %v289 = vadd.f32 0.0, %v288
  %290 = vmatprep.mubr.bf16.mxu0 %v246
  %291 = vmatmul.mubr.bf16.gmra.mrb[0].mxu0 %v95
  %v292 = vpop.f32.mrb[0].mxu0
  %v293 = vadd.f32 0.0, %v292
  %v294 = vpop.f32.mrb[0].mxu0
  %v295 = vadd.f32 0.0, %v294
  %v296 = vpop.f32.mrb[0].mxu0
  %v297 = vadd.f32 0.0, %v296
  %v298 = vpop.f32.mrb[0].mxu0
  %v299 = vadd.f32 0.0, %v298
  %300 = vdwg.mxu0
  %v301 = vpack.c.bf16 %v287, %v283
  %v302 = vpack.c.bf16 %v289, %v285
  %v305 = vunpack.c.l.b16 %v301
  %v306 = vunpack.c.l.b16 %v302
  %v307 = vunpack.c.h.b16 %v301
  %v308 = vunpack.c.h.b16 %v302
  %v309 = vpack.c.b16 %v306, %v305
  %v310 = vpack.c.b16 %v308, %v307
  %313 = vst [vmem:[%s2] sm:$0xff] %v309
  %314 = vst [vmem:[%s2 + $0x8] sm:$0xff] %v310
  %v315 = vpack.c.bf16 %v297, %v293
  %v316 = vpack.c.bf16 %v299, %v295
  %v319 = vunpack.c.l.b16 %v315
  %v320 = vunpack.c.l.b16 %v316
  %v321 = vunpack.c.h.b16 %v315
  %v322 = vunpack.c.h.b16 %v316
  %v323 = vpack.c.b16 %v320, %v319
  %v324 = vpack.c.b16 %v322, %v321
  %s327 = scalar_lea.vmem %s2, 16
  %328 = vst [vmem:[%s327] sm:$0xff] %v323
  %329 = vst [vmem:[%s327 + $0x8] sm:$0xff] %v324
  // Predicated region
  $region10: #{_lambda_.1} parent=0 // pred_check
    _
  $region11: #{_lambda_.1} parent=0 // pred_check_branch
    %331 = sbr.rel (0) target = $region13
  $region12: #{_lambda_.1} parent=0 // pred_region
    _
  $region13: #{_lambda_.1} parent=0 // pred_fallthru
    _
  // Predicated region
  $region14: #{_lambda_.1} parent=0 // pred_check
    _
  $region15: #{_lambda_.1} parent=0 // pred_check_branch
    %333 = sbr.rel (0) target = $region17
  $region16: #{_lambda_.1} parent=0 // pred_region
    _
  $region17: #{_lambda_.1} parent=0 // pred_fallthru
    _

</llo_original>
